<compile_context>
chip_gen: v7x
topology: tpu7x:2x2x1
jax: 0.10.0
libtpu: 0.0.40
codegen_flags: <defaults>
</compile_context>

<pallas_src>
import jax
import jax.numpy as jnp
from jax.experimental import pallas as pl
from jax.experimental.pallas import tpu as pltpu


def cam_kernel(w_ref, feat_ref, out_ref):
    """One slab of F frames per grid step.

    w_ref   : (F, nc)     f32  pre-gathered top-1 classifier rows.
    feat_ref: (F, nc, hw) f32  features for F frames (native layout).
    out_ref : (F, hw)     f32  CAM scaled to [0, 255].
    """
    n_frames = out_ref.shape[0]

    # cam[f, x] = sum_c w[f, c] * feat[f, c, x]
    # Per-frame (1, nc) x (nc, hw) MXU dot, f32 accumulate.  The MXU is
    # otherwise idle in this kernel, and this avoids materializing an
    # (nc, hw) f32 upcast for a VPU/XLU reduce (which spills at real nc).
    rows = []
    for f in range(n_frames):                      # static unroll, F <= 8
        w_row = w_ref[pl.ds(f, 1), :]              # (1, nc)
        rows.append(jnp.dot(w_row, feat_ref[f],
                            preferred_element_type=jnp.float32))   # (1, hw)
    cam = rows[0] if n_frames == 1 else jnp.concatenate(rows, axis=0)

    # softmax over spatial positions (per frame), on the whole (F, hw) slab
    cmax = jnp.max(cam, axis=-1, keepdims=True)
    e = jnp.exp(cam - cmax)
    inv_sum = pl.reciprocal(jnp.sum(e, axis=-1, keepdims=True), approx=True)
    p = e * inv_sum

    # min-max normalize with the 255 scale folded into the final multiply.
    pmin = jnp.min(p, axis=-1, keepdims=True)
    shifted = p - pmin
    pmax = jnp.max(shifted, axis=-1, keepdims=True)
    # NOTE: on a spatially-constant CAM the PyTorch reference hits 0/0 = NaN;
    # the 1e-12 clamp makes this kernel return an all-zero map instead.
    scale = 255.0 / jnp.maximum(pmax, 1e-12)   # exact divide: parity w/ f32 ref
    out_ref[...] = jnp.clip(shifted * scale, 0.0, 255.0)


def _frames_per_step(bz, nc, hw):
    """Largest power-of-two divisor of bz, capped at 8 (full sublane tile)."""
    f = 1
    while f < 8 and bz % (2 * f) == 0:
        f *= 2
    # Keep two pipeline buffers of the f32 feat slab well under v5e's 16 MiB
    # default scoped-VMEM so no vmem_limit override is needed anywhere.
    while f > 1 and 2 * f * nc * hw * 4 > (12 << 20):
        f //= 2
    return f


def attention_cam(logit, weight_softmax, feature_conv):
    """Batched CAM. Returns uint8 array of shape (bz, h, w), matching the
    reference up to (and excluding) the cv2 resize/colormap/blend steps."""
    bz, nc, h, w = feature_conv.shape
    hw = h * w

    # top-1 class == argmax(softmax(logit)) == descending-sort idx[:, 0]
    # (only divergence: exact logit ties, which are benign).
    h_x = jax.nn.softmax(logit.astype(jnp.float32), axis=1)
    top_idx = jnp.argmax(h_x, axis=1)

    # Pre-gather the selected classifier rows (tiny: bz x nc x 4 B) so the
    # kernel gets full-lane row blocks and no scalar-prefetch/index plumbing.
    w_sel = weight_softmax.astype(jnp.float32)[top_idx]          # (bz, nc)

    # Native f32, no pad: block last dims equal the full array dims, Mosaic
    # handles the (8,128) layout internally -> one HBM read of feat, period.
    feat = feature_conv.reshape(bz, nc, hw).astype(jnp.float32)

    n_frames = _frames_per_step(bz, nc, hw)
    grid = (bz // n_frames,)
    # TODO(synk): on v7x megacore, batches with bz // n_frames >= 2 let
    # dimension_semantics=("parallel",) feed both TensorCores; a toy bz=2
    # collapses to a single grid step.

    cost = pl.CostEstimate(
        flops=2 * bz * nc * hw + 8 * bz * hw,
        transcendentals=bz * hw,
        bytes_accessed=bz * nc * hw * 4 + bz * nc * 4 + bz * hw * 4,
    )

    cam = pl.pallas_call(
        cam_kernel,
        out_shape=jax.ShapeDtypeStruct((bz, hw), jnp.float32),
        grid=grid,
        in_specs=[
            # tiny per-step row block of gathered classifier weights
            pl.BlockSpec((n_frames, nc), lambda b: (b, 0)),
            # F frames of features per step -> pipelined across the batch
            pl.BlockSpec((n_frames, nc, hw), lambda b: (b, 0, 0)),
        ],
        out_specs=pl.BlockSpec((n_frames, hw), lambda b: (b, 0)),
        compiler_params=pltpu.CompilerParams(
            dimension_semantics=("parallel",)),
        cost_estimate=cost,
    )(w_sel, feat)

    # Values are already clamped to [0, 255]; np.uint8(255 * x) truncates too.
    cam_img = cam.reshape(bz, h, w).astype(jnp.uint8)
    # TODO(synk): cv2.resize / applyColorMap / cvtColor / heatmap blending are
    # host-side OpenCV image ops with no Pallas equivalent; they are omitted.
    return cam_img


def synthetic_backbone(x, conv_w, fc_w, fc_b):
    """Tiny deterministic stand-in for the CNN backbone: 1x1 'conv' (channel
    mixing) -> feature_conv, then GAP + linear for logits.  fc_w plays the
    role of params[-2] == weight_softmax."""
    feat = jnp.einsum("oc,bchw->bohw", conv_w, x)       # [bz, nc, h, w]
    feat = jax.nn.relu(feat)
    gap = feat.mean(axis=(2, 3))                        # [bz, nc]
    logit = gap @ fc_w.T + fc_b                         # [bz, num_classes]
    return logit, feat


def reference_cam(logit, weight_softmax, feature_conv):
    """Pure-JAX f32 reference mirroring the PyTorch module."""
    bz, nc, h, w = feature_conv.shape
    feat = feature_conv.reshape(bz, nc, h * w).astype(jnp.float32)
    h_x = jax.nn.softmax(logit.astype(jnp.float32), axis=1)
    top = jnp.argmax(h_x, axis=1)
    w_sel = weight_softmax.astype(jnp.float32)[top]          # (bz, nc)
    cam = jnp.einsum("bc,bcs->bs", w_sel, feat)              # (bz, hw)
    cam = jax.nn.softmax(cam, axis=1)
    cam = cam - cam.min(axis=1, keepdims=True)
    cam = cam / cam.max(axis=1, keepdims=True)
    return (255.0 * cam).reshape(bz, h, w).astype(jnp.uint8)


if __name__ == "__main__":
    key = jax.random.PRNGKey(0)

    bz, cin, nc = 2, 4, 32
    num_classes = 16

    attention_cam_jit = jax.jit(attention_cam)

    # Two spatial sizes: 16x16 (lane-dense hw=256) and 14x14 (hw=196 exercises
    # the non-128-multiple full-dim block path with Mosaic-internal masking).
    for (h, w) in [(16, 16), (14, 14)]:
        k1, k2, k3, k4, key = jax.random.split(key, 5)
        img_variable = jax.random.normal(k1, (bz, cin, h, w), dtype=jnp.float32)
        conv_w = jax.random.normal(k2, (nc, cin), dtype=jnp.float32) * 0.1
        fc_w = jax.random.normal(k3, (num_classes, nc), dtype=jnp.float32) * 0.1
        fc_b = jax.random.normal(k4, (num_classes,), dtype=jnp.float32) * 0.01

        logit, feature_conv = synthetic_backbone(img_variable, conv_w, fc_w, fc_b)

        cam_img = jax.block_until_ready(attention_cam_jit(logit, fc_w, feature_conv))
        assert cam_img.shape == (bz, h, w) and cam_img.dtype == jnp.uint8

        ref_img = reference_cam(logit, fc_w, feature_conv)
        diff = int(jnp.max(jnp.abs(cam_img.astype(jnp.int32)
                                   - ref_img.astype(jnp.int32))))
        assert diff <= 2, f"CAM mismatch vs reference (max |diff| = {diff})"

    print("KERNEL_OK")
</pallas_src>

<mosaic_0001>
module attributes {stable_mosaic.version = 11 : i64} {
  func.func @cam_kernel(%arg0: i32, %arg1: memref<2x32xf32, #tpu.memory_space<vmem>>, %arg2: memref<2x32x256xf32, #tpu.memory_space<vmem>>, %arg3: memref<2x256xf32, #tpu.memory_space<vmem>>) attributes {dimension_semantics = [#tpu.dimension_semantics<parallel>], iteration_bounds = array<i64: 1>, scalar_prefetch = 0 : i64, scratch_operands = 0 : i64, tpu.core_type = #tpu.core_type<tc>, window_params = [{transform_indices = @transform_0, window_bounds = array<i64: 2, 32>}, {transform_indices = @transform_1, window_bounds = array<i64: 2, 32, 256>}, {transform_indices = @transform_2, window_bounds = array<i64: 2, 256>}]} {
    %c0 = arith.constant 0 : index
    %c0_0 = arith.constant 0 : index
    %0 = vector.load %arg1[%c0, %c0_0] : memref<2x32xf32, #tpu.memory_space<vmem>>, vector<1x32xf32>
    %c0_1 = arith.constant 0 : index
    %c0_2 = arith.constant 0 : index
    %c0_3 = arith.constant 0 : index
    %1 = vector.load %arg2[%c0_1, %c0_2, %c0_3] : memref<2x32x256xf32, #tpu.memory_space<vmem>>, vector<1x32x256xf32>
    %2 = vector.shape_cast %1 : vector<1x32x256xf32> to vector<32x256xf32>
    %cst = arith.constant dense<0.000000e+00> : vector<1x256xf32>
    %3 = tpu.matmul %0, %2, %cst {dimension_numbers = #tpu.dot_dimension_numbers<[1], [0], [0], [1], [0, 0, 1, 1], [], []>} : vector<1x32xf32>, vector<32x256xf32>, vector<1x256xf32> -> vector<1x256xf32>
    %c1 = arith.constant 1 : index
    %c0_4 = arith.constant 0 : index
    %4 = vector.load %arg1[%c1, %c0_4] : memref<2x32xf32, #tpu.memory_space<vmem>>, vector<1x32xf32>
    %c1_5 = arith.constant 1 : index
    %c0_6 = arith.constant 0 : index
    %c0_7 = arith.constant 0 : index
    %5 = vector.load %arg2[%c1_5, %c0_6, %c0_7] : memref<2x32x256xf32, #tpu.memory_space<vmem>>, vector<1x32x256xf32>
    %6 = vector.shape_cast %5 : vector<1x32x256xf32> to vector<32x256xf32>
    %cst_8 = arith.constant dense<0.000000e+00> : vector<1x256xf32>
    %7 = tpu.matmul %4, %6, %cst_8 {dimension_numbers = #tpu.dot_dimension_numbers<[1], [0], [0], [1], [0, 0, 1, 1], [], []>} : vector<1x32xf32>, vector<32x256xf32>, vector<1x256xf32> -> vector<1x256xf32>
    %8 = tpu.concatenate %3, %7 in 0 : vector<1x256xf32>, vector<1x256xf32> -> vector<2x256xf32>
    %cst_9 = arith.constant dense<0xFF800000> : vector<2xf32>
    %9 = vector.multi_reduction <maximumf>, %8, %cst_9 [1] : vector<2x256xf32> to vector<2xf32>
    %10 = vector.shape_cast %9 : vector<2xf32> to vector<2x1xf32>
    %11 = vector.broadcast %10 : vector<2x1xf32> to vector<2x256xf32>
    %12 = arith.subf %8, %11 : vector<2x256xf32>
    %13 = math.exp %12 : vector<2x256xf32>
    %cst_10 = arith.constant dense<0.000000e+00> : vector<2xf32>
    %14 = vector.multi_reduction <add>, %13, %cst_10 [1] : vector<2x256xf32> to vector<2xf32>
    %15 = vector.shape_cast %14 : vector<2xf32> to vector<2x1xf32>
    %16 = tpu.reciprocal %15 {approx = true} : vector<2x1xf32> -> vector<2x1xf32>
    %17 = vector.broadcast %16 : vector<2x1xf32> to vector<2x256xf32>
    %18 = arith.mulf %13, %17 : vector<2x256xf32>
    %cst_11 = arith.constant dense<0x7F800000> : vector<2xf32>
    %19 = vector.multi_reduction <minimumf>, %18, %cst_11 [1] : vector<2x256xf32> to vector<2xf32>
    %20 = vector.shape_cast %19 : vector<2xf32> to vector<2x1xf32>
    %21 = vector.broadcast %20 : vector<2x1xf32> to vector<2x256xf32>
    %22 = arith.subf %18, %21 : vector<2x256xf32>
    %cst_12 = arith.constant dense<0xFF800000> : vector<2xf32>
    %23 = vector.multi_reduction <maximumf>, %22, %cst_12 [1] : vector<2x256xf32> to vector<2xf32>
    %24 = vector.shape_cast %23 : vector<2xf32> to vector<2x1xf32>
    %cst_13 = arith.constant 9.99999996E-13 : f32
    %25 = vector.broadcast %cst_13 : f32 to vector<2x1xf32>
    %26 = arith.maximumf %24, %25 : vector<2x1xf32>
    %cst_14 = arith.constant 2.550000e+02 : f32
    %27 = vector.broadcast %cst_14 : f32 to vector<2x1xf32>
    %28 = arith.divf %27, %26 : vector<2x1xf32>
    %29 = vector.broadcast %28 : vector<2x1xf32> to vector<2x256xf32>
    %30 = arith.mulf %22, %29 : vector<2x256xf32>
    %cst_15 = arith.constant 0.000000e+00 : f32
    %cst_16 = arith.constant 2.550000e+02 : f32
    %31 = vector.broadcast %cst_15 : f32 to vector<2x256xf32>
    %32 = arith.maximumf %31, %30 : vector<2x256xf32>
    %33 = vector.broadcast %cst_16 : f32 to vector<2x256xf32>
    %34 = arith.minimumf %33, %32 : vector<2x256xf32>
    %c0_17 = arith.constant 0 : index
    %c0_18 = arith.constant 0 : index
    %35 = vector.load %arg3[%c0_17, %c0_18] : memref<2x256xf32, #tpu.memory_space<vmem>>, vector<2x256xf32>
    tpu.vector_store %arg3[%c0_17, %c0_18], %34 {strides = array<i32>} : memref<2x256xf32, #tpu.memory_space<vmem>>, vector<2x256xf32>,
    return
  }
  func.func @transform_0(%arg0: i32) -> (i32, i32) {
    %c0_i32 = arith.constant 0 : i32
    %c0_i32_0 = arith.constant 0 : i32
    return %arg0, %c0_i32 : i32, i32
  }
  func.func @transform_1(%arg0: i32) -> (i32, i32, i32) {
    %c0_i32 = arith.constant 0 : i32
    %c0_i32_0 = arith.constant 0 : i32
    %c0_i32_1 = arith.constant 0 : i32
    return %arg0, %c0_i32, %c0_i32_0 : i32, i32, i32
  }
  func.func @transform_2(%arg0: i32) -> (i32, i32) {
    %c0_i32 = arith.constant 0 : i32
    %c0_i32_0 = arith.constant 0 : i32
    return %arg0, %c0_i32 : i32, i32
  }
}

</mosaic_0001>

<llo_original>
// kernel: attention_cam.1
$region0: #{attention_cam.1}
  #allocation0 [shape = 'u32[]', space=smem, size = 0x4, offset = 0x4, fixed_abs, tag = 'smem constant byte address 0x4 - core index']
  #allocation1 [shape = 'u32[144,128]{1,0:T(1,128)}', space=vmem, size = 0x12000, scoped, tag = 'internal scratch']
  %s0 = inlined_call_operand.vmem [shape: f32[2,32], index: 0, kind: input, shape index: {}]
  %s1 = inlined_call_operand.vmem [shape: f32[2,32,256], index: 1, kind: input, shape index: {}]
  %s2 = inlined_call_operand.vmem [shape: f32[2,256], index: 2, kind: output, shape index: {}]
  %s3 = sld [smem:[#allocation0]]
  $region18: #{attention_cam.1} parent=0
    _
  %s5 = ssub.s32 1, %s3
  %s6 = scalar_select 0, %s5, %s3
  // Predicated region
  $region2: #{attention_cam.1} parent=0 // pred_check
    _
  $region3: #{attention_cam.1} parent=0 // pred_check_branch
    %8 = sbr.rel (0) target = $region5
  $region4: #{attention_cam.1} parent=0 // pred_region
    _
  $region5: #{attention_cam.1} parent=0 // pred_fallthru
    _
  // Predicated region
  $region6: #{attention_cam.1} parent=0 // pred_check
    _
  $region7: #{attention_cam.1} parent=0 // pred_check_branch
    %10 = sbr.rel (0) target = $region9
  $region8: #{attention_cam.1} parent=0 // pred_region
    _
  $region9: #{attention_cam.1} parent=0 // pred_fallthru
    _
  %v11 = vld [vmem:[%s0] sm:$0x1]
  %v12 = vld [vmem:[%s1] sm:$0xff]
  %v13 = vld [vmem:[%s1 + $0x8] sm:$0xff]
  %v14 = vld [vmem:[%s1 + $0x10] sm:$0xff]
  %v15 = vld [vmem:[%s1 + $0x18] sm:$0xff]
  %v16 = vld [vmem:[%s1 + $0x20] sm:$0xff]
  %v17 = vld [vmem:[%s1 + $0x28] sm:$0xff]
  %v18 = vld [vmem:[%s1 + $0x30] sm:$0xff]
  %v19 = vld [vmem:[%s1 + $0x38] sm:$0xff]
  %vm20 = vcmask 261120
  %v22 = vsel %vm20, %v11, 0
  %24 = vmatprep.subr.mxu0 %v13
  %25 = vmatpush1.msra.mxu0 %v12
  %26 = vmatprep.subr.mxu0 %v15
  %27 = vmatpush1.msra.mxu0 %v14
  %28 = vmatprep.subr.mxu0 %v17
  %29 = vmatpush1.msra.mxu0 %v16
  %30 = vmatprep.subr.mxu0 %v19
  %31 = vmatpush1.msra.mxu0 %v18
  %32 = vmatprep.subr.mxu0 0.0
  %33 = vmatpush1.msra.mxu0 0.0
  %34 = vmatprep.subr.mxu0 0.0
  %35 = vmatpush1.msra.mxu0 0.0
  %36 = vmatprep.subr.mxu0 0.0
  %37 = vmatpush1.msra.mxu0 0.0
  %38 = vmatprep.subr.mxu0 0.0
  %39 = vmatpush1.msra.mxu0 0.0
  %40 = vmatprep.subr.mxu0 0.0
  %41 = vmatpush1.msra.mxu0 0.0
  %42 = vmatprep.subr.mxu0 0.0
  %43 = vmatpush1.msra.mxu0 0.0
  %44 = vmatprep.subr.mxu0 0.0
  %45 = vmatpush1.msra.mxu0 0.0
  %46 = vmatprep.subr.mxu0 0.0
  %47 = vmatpush1.msra.mxu0 0.0
  %48 = vmatprep.subr.mxu0 0.0
  %49 = vmatpush1.msra.mxu0 0.0
  %50 = vmatprep.subr.mxu0 0.0
  %51 = vmatpush1.msra.mxu0 0.0
  %52 = vmatprep.subr.mxu0 0.0
  %53 = vmatpush1.msra.mxu0 0.0
  %54 = vmatprep.subr.mxu0 0.0
  %55 = vmatpush1.msra.mxu0 0.0
  %56 = vmatprep.subr.mxu0 0.0
  %57 = vmatpush1.msra.mxu0 0.0
  %58 = vmatprep.subr.mxu0 0.0
  %59 = vmatpush1.msra.mxu0 0.0
  %60 = vmatprep.subr.mxu0 0.0
  %61 = vmatpush1.msra.mxu0 0.0
  %62 = vmatprep.subr.mxu0 0.0
  %63 = vmatpush1.msra.mxu0 0.0
  %64 = vmatprep.subr.mxu0 0.0
  %65 = vmatpush1.msra.mxu0 0.0
  %66 = vmatprep.subr.mxu0 0.0
  %67 = vmatpush1.msra.mxu0 0.0
  %68 = vmatprep.subr.mxu0 0.0
  %69 = vmatpush1.msra.mxu0 0.0
  %70 = vmatprep.subr.mxu0 0.0
  %71 = vmatpush1.msra.mxu0 0.0
  %72 = vmatprep.subr.mxu0 0.0
  %73 = vmatpush1.msra.mxu0 0.0
  %74 = vmatprep.subr.mxu0 0.0
  %75 = vmatpush1.msra.mxu0 0.0
  %76 = vmatprep.subr.mxu0 0.0
  %77 = vmatpush1.msra.mxu0 0.0
  %78 = vmatprep.subr.mxu0 0.0
  %79 = vmatpush1.msra.mxu0 0.0
  %80 = vmatprep.subr.mxu0 0.0
  %81 = vmatpush1.msra.mxu0 0.0
  %82 = vmatprep.subr.mxu0 0.0
  %83 = vmatpush1.msra.mxu0 0.0
  %84 = vmatprep.subr.mxu0 0.0
  %85 = vmatpush1.msra.mxu0 0.0
  %86 = vmatprep.subr.mxu0 0.0
  %87 = vmatpush1.msra.mxu0 0.0
  %88 = vmatprep.mubr.f32.mxu0 0.0
  %89 = vmatmul.mubr.f32.gmra.mrb[0].mxu0 %v22
  %v90 = vpop.f32.mrb[0].mxu0
  %v91 = vadd.f32 0.0, %v90
  %v92 = vpop.f32.mrb[0].mxu0
  %v93 = vadd.f32 0.0, %v92
  %94 = vdwg.mxu0
  %v95 = vld [vmem:[%s0 + $0x1] sm:$0x1]
  %s96 = scalar_lea.vmem %s1, 64
  %v97 = vld [vmem:[%s96] sm:$0xff]
  %v98 = vld [vmem:[%s96 + $0x8] sm:$0xff]
  %v99 = vld [vmem:[%s96 + $0x10] sm:$0xff]
  %v100 = vld [vmem:[%s96 + $0x18] sm:$0xff]
  %v101 = vld [vmem:[%s96 + $0x20] sm:$0xff]
  %v102 = vld [vmem:[%s96 + $0x28] sm:$0xff]
  %v103 = vld [vmem:[%s96 + $0x30] sm:$0xff]
  %v104 = vld [vmem:[%s96 + $0x38] sm:$0xff]
  %v106 = vsel %vm20, %v95, 0
  %108 = vmatprep.subr.mxu0 %v98
  %109 = vmatpush1.msra.mxu0 %v97
  %110 = vmatprep.subr.mxu0 %v100
  %111 = vmatpush1.msra.mxu0 %v99
  %112 = vmatprep.subr.mxu0 %v102
  %113 = vmatpush1.msra.mxu0 %v101
  %114 = vmatprep.subr.mxu0 %v104
  %115 = vmatpush1.msra.mxu0 %v103
  %116 = vmatprep.subr.mxu0 0.0
  %117 = vmatpush1.msra.mxu0 0.0
  %118 = vmatprep.subr.mxu0 0.0
  %119 = vmatpush1.msra.mxu0 0.0
  %120 = vmatprep.subr.mxu0 0.0
  %121 = vmatpush1.msra.mxu0 0.0
  %122 = vmatprep.subr.mxu0 0.0
  %123 = vmatpush1.msra.mxu0 0.0
  %124 = vmatprep.subr.mxu0 0.0
  %125 = vmatpush1.msra.mxu0 0.0
  %126 = vmatprep.subr.mxu0 0.0
  %127 = vmatpush1.msra.mxu0 0.0
  %128 = vmatprep.subr.mxu0 0.0
  %129 = vmatpush1.msra.mxu0 0.0
  %130 = vmatprep.subr.mxu0 0.0
  %131 = vmatpush1.msra.mxu0 0.0
  %132 = vmatprep.subr.mxu0 0.0
  %133 = vmatpush1.msra.mxu0 0.0
  %134 = vmatprep.subr.mxu0 0.0
  %135 = vmatpush1.msra.mxu0 0.0
  %136 = vmatprep.subr.mxu0 0.0
  %137 = vmatpush1.msra.mxu0 0.0
  %138 = vmatprep.subr.mxu0 0.0
  %139 = vmatpush1.msra.mxu0 0.0
  %140 = vmatprep.subr.mxu0 0.0
  %141 = vmatpush1.msra.mxu0 0.0
  %142 = vmatprep.subr.mxu0 0.0
  %143 = vmatpush1.msra.mxu0 0.0
  %144 = vmatprep.subr.mxu0 0.0
  %145 = vmatpush1.msra.mxu0 0.0
  %146 = vmatprep.subr.mxu0 0.0
  %147 = vmatpush1.msra.mxu0 0.0
  %148 = vmatprep.subr.mxu0 0.0
  %149 = vmatpush1.msra.mxu0 0.0
  %150 = vmatprep.subr.mxu0 0.0
  %151 = vmatpush1.msra.mxu0 0.0
  %152 = vmatprep.subr.mxu0 0.0
  %153 = vmatpush1.msra.mxu0 0.0
  %154 = vmatprep.subr.mxu0 0.0
  %155 = vmatpush1.msra.mxu0 0.0
  %156 = vmatprep.subr.mxu0 0.0
  %157 = vmatpush1.msra.mxu0 0.0
  %158 = vmatprep.subr.mxu0 0.0
  %159 = vmatpush1.msra.mxu0 0.0
  %160 = vmatprep.subr.mxu0 0.0
  %161 = vmatpush1.msra.mxu0 0.0
  %162 = vmatprep.subr.mxu0 0.0
  %163 = vmatpush1.msra.mxu0 0.0
  %164 = vmatprep.subr.mxu0 0.0
  %165 = vmatpush1.msra.mxu0 0.0
  %166 = vmatprep.subr.mxu0 0.0
  %167 = vmatpush1.msra.mxu0 0.0
  %168 = vmatprep.subr.mxu0 0.0
  %169 = vmatpush1.msra.mxu0 0.0
  %170 = vmatprep.subr.mxu0 0.0
  %171 = vmatpush1.msra.mxu0 0.0
  %172 = vmatprep.mubr.f32.mxu0 0.0
  %173 = vmatmul.mubr.f32.gmra.mrb[0].mxu0 %v106
  %v174 = vpop.f32.mrb[0].mxu0
  %v175 = vadd.f32 0.0, %v174
  %v176 = vpop.f32.mrb[0].mxu0
  %v177 = vadd.f32 0.0, %v176
  %178 = vdwg.mxu0
  %v181 = vrot.slane %v175, 7
  %v182 = vrot.slane %v177, 7
  %vm185 = vcmask 1040384
  %v186 = vsel %vm185, %v91, %v181
  %v187 = vsel %vm185, %v93, %v182
  %vm188 = vcmask 1041408
  %v189 = vsel %vm188, %v186, -inf
  %v190 = vsel %vm188, %v187, -inf
  %v191 = vmax.f32 %v189, %v190
  %192 = vmax.xlane.f32.xlu0 %v191
  %v193 = vpop.xlane.xlu0 %192
  %v194 = vsub.f32 %v186, %v193
  %v195 = vsub.f32 %v187, %v193
  %v196 = vmul.f32 %v194, 1.442695
  %v197 = vpow.pop %v196
  %v198 = vmul.f32 %v195, 1.442695
  %v199 = vpow.pop %v198
  %v200 = vsel %vm188, %v197, 0.0
  %v201 = vsel %vm188, %v199, 0.0
  %v202 = vadd.f32 %v200, %v201
  %203 = vadd.xlane.f32.xlu0 %v202
  %v204 = vpop.xlane.xlu0 %203
  %v205 = vrcp.pop %v204
  %v206 = vmul.f32 %v197, %v205
  %v207 = vmul.f32 %v199, %v205
  %v208 = vsel %vm188, %v206, inf
  %v209 = vsel %vm188, %v207, inf
  %v210 = vmin.f32 %v208, %v209
  %211 = vmin.xlane.f32.xlu0 %v210
  %v212 = vpop.xlane.xlu0 %211
  %v213 = vsub.f32 %v206, %v212
  %v214 = vsub.f32 %v207, %v212
  %v215 = vsel %vm188, %v213, -inf
  %v216 = vsel %vm188, %v214, -inf
  %v217 = vmax.f32 %v215, %v216
  %218 = vmax.xlane.f32.xlu0 %v217
  %v219 = vpop.xlane.xlu0 %218
  %v220 = vmax.f32 %v219, 1e-12
  %v221 = vrcp.pop %v220
  %v222 = vmul.f32 255.0, %v221
  %v223 = vmul.f32 %v213, %v222
  %v224 = vmul.f32 %v214, %v222
  %v225 = vmax.f32 %v223, 0.0
  %v226 = vmax.f32 %v224, 0.0
  %v227 = vmin.f32 %v225, 255.0
  %v228 = vmin.f32 %v226, 255.0
  %v231 = vcombine.low %v227, %v228
  %v233 = vunpack.c.l.s4 1983009808
  %v234 = vunpack.c.0.s8 %v233
  %v235 = vlaneseq
  %v236 = vshrl.u32 %v235, 7
  %v237 = vsub.s32 %v234, %v236
  %v238 = vrot.slane %v231, %v237
  %240 = vst [vmem:[%s2] sm:$0xf] %v238
  // Predicated region
  $region10: #{attention_cam.1} parent=0 // pred_check
    _
  $region11: #{attention_cam.1} parent=0 // pred_check_branch
    %242 = sbr.rel (0) target = $region13
  $region12: #{attention_cam.1} parent=0 // pred_region
    _
  $region13: #{attention_cam.1} parent=0 // pred_fallthru
    _
  // Predicated region
  $region14: #{attention_cam.1} parent=0 // pred_check
    _
  $region15: #{attention_cam.1} parent=0 // pred_check_branch
    %244 = sbr.rel (0) target = $region17
  $region16: #{attention_cam.1} parent=0 // pred_region
    _
  $region17: #{attention_cam.1} parent=0 // pred_fallthru
    _

</llo_original>
